<compile_context>
chip_gen: v7x
topology: tpu7x:2x2x1
jax: 0.10.0
libtpu: 0.0.40
codegen_flags: <defaults>
</compile_context>

<pallas_src>
import functools

import jax
import jax.numpy as jnp
from jax import lax
from jax.experimental import pallas as pl
from jax.experimental.pallas import tpu as pltpu


def _round_up(x, m):
    return (x + m - 1) // m * m


def _conv_bias_act_kernel(p_ref, w_ref, b_ref, o_ref, *, apply_relu):
    """Fused (TILE_M, K*K*C_in) @ (K*K*C_in, C_out) + bias (+ ReLU) on the MXU.

    p_ref : (TILE_M, K*K*C_in)  bf16 im2col patches
    w_ref : (K*K*C_in, C_out)   bf16 reshaped conv weight
    b_ref : (1, C_out)          f32 bias
    o_ref : (TILE_M, C_out)     output tile
    """
    acc = jnp.dot(p_ref[...], w_ref[...], preferred_element_type=jnp.float32)
    acc = acc + b_ref[...]  # (1, C_out) broadcasts over rows, f32
    if apply_relu:
        acc = jnp.maximum(acc, 0.0)
    o_ref[...] = acc.astype(o_ref.dtype)


@functools.partial(jax.jit,
                   static_argnames=("stride", "padding", "activation", "tile_m"))
def conv_layer_forward(x_nchw, weight_oihw, bias, *, stride=1, padding=0,
                       activation="relu", tile_m=256):
    """Pallas ConvLayer forward. x_nchw: (B, C_in, H, W) -> (B, C_out, H_out, W_out)."""
    B, C_in, H, W = x_nchw.shape
    C_out, C_in_w, K, K2 = weight_oihw.shape
    assert C_in_w == C_in and K == K2
    H_out = (H + 2 * padding - K) // stride + 1
    W_out = (W + 2 * padding - K) // stride + 1
    KKC = K * K * C_in

    # ---- wrapper glue (fused by XLA under jit): NCHW->NHWC, pad, im2col ----
    x = jnp.transpose(x_nchw, (0, 2, 3, 1))  # (B, H, W, C_in)
    if padding:
        x = jnp.pad(x, ((0, 0), (padding, padding), (padding, padding), (0, 0)))
    cols = []
    for dy in range(K):
        for dx in range(K):
            cols.append(x[:, dy:dy + (H_out - 1) * stride + 1:stride,
                            dx:dx + (W_out - 1) * stride + 1:stride, :])
    # Tap-major (dy, dx, c) channel order -> matches the weight reshape below.
    patches = jnp.concatenate(cols, axis=-1)          # (B, H_out, W_out, K*K*C_in)
    patches = patches.reshape(B * H_out * W_out, KKC)

    # Weight OIHW -> (K, K, C_in, C_out) -> (K*K*C_in, C_out) in (dy, dx, c) order.
    w = jnp.transpose(weight_oihw, (2, 3, 1, 0)).reshape(KKC, C_out)

    M = B * H_out * W_out
    tm = min(tile_m, _round_up(M, 8))
    M_pad = _round_up(M, tm)
    if M_pad != M:
        patches = jnp.pad(patches, ((0, M_pad - M), (0, 0)))

    patches_bf16 = patches.astype(jnp.bfloat16)
    w_bf16 = w.astype(jnp.bfloat16)
    b2d = bias.astype(jnp.float32).reshape(1, C_out)

    kernel = functools.partial(_conv_bias_act_kernel,
                               apply_relu=activation is not None)

    out_flat = pl.pallas_call(
        kernel,
        out_shape=jax.ShapeDtypeStruct((M_pad, C_out), x_nchw.dtype),
        grid_spec=pltpu.PrefetchScalarGridSpec(
            num_scalar_prefetch=0,
            grid=(M_pad // tm,),
            in_specs=[
                pl.BlockSpec((tm, KKC), lambda i: (i, 0)),
                pl.BlockSpec((KKC, C_out), lambda i: (0, 0)),
                pl.BlockSpec((1, C_out), lambda i: (0, 0)),
            ],
            out_specs=pl.BlockSpec((tm, C_out), lambda i: (i, 0)),
        ),
        compiler_params=pltpu.CompilerParams(
            dimension_semantics=("parallel",)),
    )(patches_bf16, w_bf16, b2d)

    out = out_flat[:M].reshape(B, H_out, W_out, C_out)
    return jnp.transpose(out, (0, 3, 1, 2))  # back to NCHW


def _reference_forward(x, weight_oihw, bias, *, stride, padding, activation):
    """Plain-JAX reference matching the PyTorch ConvLayer."""
    out = lax.conv_general_dilated(
        x, weight_oihw, window_strides=(stride, stride),
        padding=((padding, padding), (padding, padding)),
        dimension_numbers=("NCHW", "OIHW", "NCHW"))
    out = out + bias.reshape(1, -1, 1, 1)
    if activation is not None:
        out = jnp.maximum(out, 0.0)
    return out


if __name__ == "__main__":
    # Small deterministic config consistent with ConvLayer usage in e2vid.
    B, C_in, H, W = 2, 4, 16, 16
    C_out, K = 32, 3
    stride, padding = 1, 1  # ConvLayer(..., stride=1, padding=kernel_size//2)

    key = jax.random.PRNGKey(0)
    kx, kw, kb = jax.random.split(key, 3)

    x = jax.random.normal(kx, (B, C_in, H, W), dtype=jnp.float32)
    # nn.Conv2d default init: U(-1/sqrt(fan_in), 1/sqrt(fan_in)), OIHW layout.
    fan_in = C_in * K * K
    bound = 1.0 / (fan_in ** 0.5)
    weight = jax.random.uniform(kw, (C_out, C_in, K, K),
                                minval=-bound, maxval=bound, dtype=jnp.float32)
    bias = jax.random.uniform(kb, (C_out,),
                              minval=-bound, maxval=bound, dtype=jnp.float32)

    out = conv_layer_forward(x, weight, bias, stride=stride, padding=padding,
                             activation="relu")
    out = jax.block_until_ready(out)
    assert out.shape == (B, C_out, H, W)

    # Matched-precision reference (bf16-rounded operands, f32 conv) -> tight check.
    x_bf = x.astype(jnp.bfloat16).astype(jnp.float32)
    w_bf = weight.astype(jnp.bfloat16).astype(jnp.float32)
    ref_bf = _reference_forward(x_bf, w_bf, bias, stride=stride,
                                padding=padding, activation="relu")
    assert jnp.allclose(out, ref_bf, atol=1e-4, rtol=1e-4)

    # Full-f32 reference -> loose check (bf16 MXU operands).
    ref = _reference_forward(x, weight, bias, stride=stride,
                             padding=padding, activation="relu")
    assert jnp.allclose(out, ref, atol=2e-2, rtol=2e-2)

    # Also exercise the module defaults: padding=0 (VALID) and activation=None.
    out_valid = jax.block_until_ready(
        conv_layer_forward(x, weight, bias, stride=1, padding=0, activation="relu"))
    ref_valid = _reference_forward(x_bf, w_bf, bias, stride=1, padding=0,
                                   activation="relu")
    assert out_valid.shape == (B, C_out, H - K + 1, W - K + 1)
    assert jnp.allclose(out_valid, ref_valid, atol=1e-4, rtol=1e-4)

    out_lin = jax.block_until_ready(
        conv_layer_forward(x, weight, bias, stride=1, padding=1, activation=None))
    ref_lin = _reference_forward(x_bf, w_bf, bias, stride=1, padding=1,
                                 activation=None)
    assert jnp.allclose(out_lin, ref_lin, atol=1e-4, rtol=1e-4)

    print("KERNEL_OK")
</pallas_src>

<mosaic_0001>
module attributes {stable_mosaic.version = 11 : i64} {
  func.func @_conv_bias_act_kernel(%arg0: i32, %arg1: memref<256x36xbf16, #tpu.memory_space<vmem>>, %arg2: memref<36x32xbf16, #tpu.memory_space<vmem>>, %arg3: memref<1x32xf32, #tpu.memory_space<vmem>>, %arg4: memref<256x32xf32, #tpu.memory_space<vmem>>) attributes {dimension_semantics = [#tpu.dimension_semantics<parallel>], iteration_bounds = array<i64: 2>, scalar_prefetch = 0 : i64, scratch_operands = 0 : i64, tpu.core_type = #tpu.core_type<tc>, window_params = [{transform_indices = @transform_0, window_bounds = array<i64: 256, 36>}, {pipeline_mode = #tpu.pipeline_mode<synchronous>, transform_indices = @transform_1, window_bounds = array<i64: 36, 32>}, {pipeline_mode = #tpu.pipeline_mode<synchronous>, transform_indices = @transform_2, window_bounds = array<i64: 1, 32>}, {transform_indices = @transform_3, window_bounds = array<i64: 256, 32>}]} {
    %c0 = arith.constant 0 : index
    %c0_0 = arith.constant 0 : index
    %0 = vector.load %arg1[%c0, %c0_0] : memref<256x36xbf16, #tpu.memory_space<vmem>>, vector<256x36xbf16>
    %c0_1 = arith.constant 0 : index
    %c0_2 = arith.constant 0 : index
    %1 = vector.load %arg2[%c0_1, %c0_2] : memref<36x32xbf16, #tpu.memory_space<vmem>>, vector<36x32xbf16>
    %cst = arith.constant dense<0.000000e+00> : vector<256x32xf32>
    %2 = tpu.matmul %0, %1, %cst {dimension_numbers = #tpu.dot_dimension_numbers<[1], [0], [0], [1], [0, 0, 1, 1], [], []>} : vector<256x36xbf16>, vector<36x32xbf16>, vector<256x32xf32> -> vector<256x32xf32>
    %c0_3 = arith.constant 0 : index
    %c0_4 = arith.constant 0 : index
    %3 = vector.load %arg3[%c0_3, %c0_4] : memref<1x32xf32, #tpu.memory_space<vmem>>, vector<1x32xf32>
    %4 = vector.broadcast %3 : vector<1x32xf32> to vector<256x32xf32>
    %5 = arith.addf %2, %4 : vector<256x32xf32>
    %cst_5 = arith.constant 0.000000e+00 : f32
    %6 = vector.broadcast %cst_5 : f32 to vector<256x32xf32>
    %7 = arith.maximumf %5, %6 : vector<256x32xf32>
    %c0_6 = arith.constant 0 : index
    %c0_7 = arith.constant 0 : index
    %8 = vector.load %arg4[%c0_6, %c0_7] : memref<256x32xf32, #tpu.memory_space<vmem>>, vector<256x32xf32>
    tpu.vector_store %arg4[%c0_6, %c0_7], %7 {strides = array<i32>} : memref<256x32xf32, #tpu.memory_space<vmem>>, vector<256x32xf32>,
    return
  }
  func.func @transform_0(%arg0: i32) -> (i32, i32) {
    %c0_i32 = arith.constant 0 : i32
    %c0_i32_0 = arith.constant 0 : i32
    return %arg0, %c0_i32 : i32, i32
  }
  func.func @transform_1(%arg0: i32) -> (i32, i32) {
    %c0_i32 = arith.constant 0 : i32
    %c0_i32_0 = arith.constant 0 : i32
    %c0_i32_1 = arith.constant 0 : i32
    return %c0_i32, %c0_i32_0 : i32, i32
  }
  func.func @transform_2(%arg0: i32) -> (i32, i32) {
    %c0_i32 = arith.constant 0 : i32
    %c0_i32_0 = arith.constant 0 : i32
    %c0_i32_1 = arith.constant 0 : i32
    return %c0_i32, %c0_i32_0 : i32, i32
  }
  func.func @transform_3(%arg0: i32) -> (i32, i32) {
    %c0_i32 = arith.constant 0 : i32
    %c0_i32_0 = arith.constant 0 : i32
    return %arg0, %c0_i32 : i32, i32
  }
}

</mosaic_0001>

<llo_original>
// kernel: conv_layer_forward.1
$region0: #{conv_layer_forward.1}
  #allocation0 [shape = 'u32[]', space=smem, size = 0x4, offset = 0x4, fixed_abs, tag = 'smem constant byte address 0x4 - core index']
  #allocation1 [shape = 'u32[144,128]{1,0:T(1,128)}', space=vmem, size = 0x12000, scoped, tag = 'internal scratch']
  %s0 = inlined_call_operand.vmem [shape: bf16[512,36], index: 0, kind: input, shape index: {}]
  %s1 = inlined_call_operand.vmem [shape: bf16[36,32], index: 1, kind: input, shape index: {}]
  %s2 = inlined_call_operand.vmem [shape: f32[1,32], index: 2, kind: input, shape index: {}]
  %s3 = inlined_call_operand.hbm [shape: f32[512,32], index: 3, kind: output, shape index: {}]
  %s4 = sld [smem:[#allocation0]]
  $region45: #{conv_layer_forward.1} parent=0
    _
  %s6 = ssub.s32 1, %s4
  %s7 = scalar_select 0, %s6, %s4
  $region1: #{conv_layer_forward.1} parent=0
    #allocation2 [shape = 'u8[262144]{0}', space=vmem, size = 0x40000, scoped, tag = 'output window, operand 0']
    #allocation3 [shape = 's32[2]{0}', space=sflag, size = 0x8, scoped, tag = 'scoped memory for conv_layer_forward.1']
    %8 = vsyncpa [#allocation3], 0
    %s9 = scalar_lea.sflag [#allocation3], 1
    %10 = vsyncpa %s9, 0
    loop: start=0, step=1, limit=4
    $region2: #{conv_layer_forward.1} parent=1 // loop_pre_header
      _
    $region3: #{conv_layer_forward.1} parent=1 // loop_header
      %s12 = sphi 0, %s16
      %p13 = scmp.ge.s32.totalorder %s12, 4
      %s22 = sphi 0, %s24
      %s25 = sphi 0, %s22
      %s26 = sphi 0, %s25
      %s42 = sphi 0, %s26
      %s46 = sphi 0, %s46
      %s48 = sphi 0, %s46
      %s49 = sphi 0, %s48
      %s63 = sphi 0, %s49
      %s67 = sphi 0, %s67
      %s69 = sphi 0, %s67
      %s70 = sphi 0, %s69
      %s84 = sphi 0, %s70
      %s90 = sphi 0, %s92
      %s93 = sphi 0, %s90
      %s94 = sphi 0, %s93
      %s110 = sphi 0, %s94
    $region4: #{conv_layer_forward.1} parent=1 // loop_header_branch
      %15 = sbr.rel (%p13) target = $region8
    $region5: #{conv_layer_forward.1} parent=1 // loop_body
      %s17 = ssub.s32 %s12, 1
      %s18 = ssub.s32 %s12, 2
      %s19 = sadd.s32 %s12, 1
      %s20 = ssub.s32 %s12, %s19
      %p21 = scmp.eq.s32.totalorder %s20, 0
      %s23 = sadd.s32 %s22, 1
      %s24 = scalar_select %p21, %s22, %s23
      %p27 = pneg %p21
      %p28 = scmp.eq.s32.totalorder %s12, 1
      %p29 = por %p27, %p28
      %p30 = scmp.ne.s32.totalorder %s22, %s25
      %p31 = scmp.eq.s32.totalorder %s12, 0
      %p32 = por %p30, %p31
      %p33 = scmp.ne.s32.totalorder %s22, %s25
      %p34 = scmp.eq.s32.totalorder %s17, 1
      %p35 = por %p33, %p34
      %p36 = scmp.ne.s32.totalorder %s25, %s26
      %p37 = scmp.eq.s32.totalorder %s17, 0
      %p38 = por %p36, %p37
      %p39 = scmp.ne.s32.totalorder %s25, %s26
      %p40 = scmp.eq.s32.totalorder %s18, 1
      %p41 = por %p39, %p40
      %p43 = scmp.ne.s32.totalorder %s26, %s42
      %p44 = scmp.eq.s32.totalorder %s18, 0
      %p45 = por %p43, %p44
      %s47 = sadd.s32 %s46, 1
      %p50 = scmp.eq.s32.totalorder %s12, 1
      %p51 = scmp.ne.s32.totalorder %s46, %s48
      %p52 = scmp.eq.s32.totalorder %s12, 0
      %p53 = por %p51, %p52
      %p54 = scmp.ne.s32.totalorder %s46, %s48
      %p55 = scmp.eq.s32.totalorder %s17, 1
      %p56 = por %p54, %p55
      %p57 = scmp.ne.s32.totalorder %s48, %s49
      %p58 = scmp.eq.s32.totalorder %s17, 0
      %p59 = por %p57, %p58
      %p60 = scmp.ne.s32.totalorder %s48, %s49
      %p61 = scmp.eq.s32.totalorder %s18, 1
      %p62 = por %p60, %p61
      %p64 = scmp.ne.s32.totalorder %s49, %s63
      %p65 = scmp.eq.s32.totalorder %s18, 0
      %p66 = por %p64, %p65
      %s68 = sadd.s32 %s67, 1
      %p71 = scmp.eq.s32.totalorder %s12, 1
      %p72 = scmp.ne.s32.totalorder %s67, %s69
      %p73 = scmp.eq.s32.totalorder %s12, 0
      %p74 = por %p72, %p73
      %p75 = scmp.ne.s32.totalorder %s67, %s69
      %p76 = scmp.eq.s32.totalorder %s17, 1
      %p77 = por %p75, %p76
      %p78 = scmp.ne.s32.totalorder %s69, %s70
      %p79 = scmp.eq.s32.totalorder %s17, 0
      %p80 = por %p78, %p79
      %p81 = scmp.ne.s32.totalorder %s69, %s70
      %p82 = scmp.eq.s32.totalorder %s18, 1
      %p83 = por %p81, %p82
      %p85 = scmp.ne.s32.totalorder %s70, %s84
      %p86 = scmp.eq.s32.totalorder %s18, 0
      %p87 = por %p85, %p86
      %s88 = ssub.s32 %s12, %s19
      %p89 = scmp.eq.s32.totalorder %s88, 0
      %s91 = sadd.s32 %s90, 1
      %s92 = scalar_select %p89, %s90, %s91
      %p95 = pneg %p89
      %p96 = scmp.eq.s32.totalorder %s12, 1
      %p97 = por %p95, %p96
      %p98 = scmp.ne.s32.totalorder %s90, %s93
      %p99 = scmp.eq.s32.totalorder %s12, 0
      %p100 = por %p98, %p99
      %p101 = scmp.ne.s32.totalorder %s90, %s93
      %p102 = scmp.eq.s32.totalorder %s17, 1
      %p103 = por %p101, %p102
      %p104 = scmp.ne.s32.totalorder %s93, %s94
      %p105 = scmp.eq.s32.totalorder %s17, 0
      %p106 = por %p104, %p105
      %p107 = scmp.ne.s32.totalorder %s93, %s94
      %p108 = scmp.eq.s32.totalorder %s18, 1
      %p109 = por %p107, %p108
      %p111 = scmp.ne.s32.totalorder %s94, %s110
      %p112 = scmp.eq.s32.totalorder %s18, 0
      %p113 = por %p111, %p112
      %p114 = scmp.le.s32.totalorder 1, %s12
      %p115 = scmp.lt.s32.totalorder %s12, 3
      %p116 = pnand %p114, %p115
      %p117 = pneg %p116
      // Predicated region
      $region9: #{conv_layer_forward.1} parent=5 // pred_check
        _
      $region10: #{conv_layer_forward.1} parent=5 // pred_check_branch
        %119 = sbr.rel (%p116) target = $region12
      $region11: #{conv_layer_forward.1} parent=5 // pred_region
        %s120 = ssub.s32 %s12, 1
        // Predicated region
        $region13: #{conv_layer_forward.1} parent=11 // pred_check
          %p121 = pneg %p59
        $region14: #{conv_layer_forward.1} parent=11 // pred_check_branch
          %123 = sbr.rel (%p121) target = $region16
        $region15: #{conv_layer_forward.1} parent=11 // pred_region
          _
        $region16: #{conv_layer_forward.1} parent=11 // pred_fallthru
          _
        // Predicated region
        $region17: #{conv_layer_forward.1} parent=11 // pred_check
          %p124 = pneg %p80
        $region18: #{conv_layer_forward.1} parent=11 // pred_check_branch
          %126 = sbr.rel (%p124) target = $region20
        $region19: #{conv_layer_forward.1} parent=11 // pred_region
          _
        $region20: #{conv_layer_forward.1} parent=11 // pred_fallthru
          _
      $region12: #{conv_layer_forward.1} parent=5 // pred_fallthru
        _
      %p127 = scmp.lt.s32.totalorder %s12, 2
      // Predicated region
      $region21: #{conv_layer_forward.1} parent=5 // pred_check
        %p128 = pneg %p127
      $region22: #{conv_layer_forward.1} parent=5 // pred_check_branch
        %130 = sbr.rel (%p128) target = $region24
      $region23: #{conv_layer_forward.1} parent=5 // pred_region
        // Predicated region
        $region25: #{conv_layer_forward.1} parent=23 // pred_check
          %p131 = pneg %p32
        $region26: #{conv_layer_forward.1} parent=23 // pred_check_branch
          %133 = sbr.rel (%p131) target = $region28
        $region27: #{conv_layer_forward.1} parent=23 // pred_region
          %s134 = smul.u32 32, %s12
          %p135 = scmp.lt.s32.totalorder %s134, 63
          %s136 = scalar_select %p135, %s134, 63
          %s137 = smul.addr %s136, 4
          %s138 = scalar_lea.vmem %s0, %s137
          %s139 = smul.u32 32, %s12
        $region28: #{conv_layer_forward.1} parent=23 // pred_fallthru
          _
      $region24: #{conv_layer_forward.1} parent=5 // pred_fallthru
        _
      %p140 = scmp.le.s32.totalorder 1, %s12
      %p141 = scmp.lt.s32.totalorder %s12, 3
      %p142 = pnand %p140, %p141
      %p143 = pneg %p142
      // Predicated region
      $region29: #{conv_layer_forward.1} parent=5 // pred_check
        _
      $region30: #{conv_layer_forward.1} parent=5 // pred_check_branch
        %145 = sbr.rel (%p142) target = $region32
      $region31: #{conv_layer_forward.1} parent=5 // pred_region
        %s146 = ssub.s32 %s12, 1
        %s147 = smul.u32 32, %s17
        %p148 = scmp.lt.s32.totalorder %s147, 63
        %s149 = scalar_select %p148, %s147, 63
        %s150 = smul.addr %s149, 4
        %s151 = scalar_lea.vmem %s0, %s150
        %p152 = pneg %p38
        %p153 = pneg %p35
        %p154 = pneg %p59
        %p155 = pneg %p56
        %p156 = pneg %p80
        %p157 = pneg %p77
        %p158 = pneg %p106
        %p159 = pneg %p103
        %s160 = sand.u32 %s93, 1
        %s161 = scalar_lea.sflag [#allocation3], %s160
        %s162 = sand.u32 %s93, 1
        %s163 = smul.addr %s162, 256
        %s164 = scalar_lea.vmem [#allocation2], %s163
        %s165 = smul.u32 32, %s17
        %p166 = scmp.lt.s32.totalorder %s165, 63
        %s167 = scalar_select %p166, %s165, 63
        %s168 = smul.addr %s167, 4
        %s169 = scalar_lea.vmem %s0, %s168
        %s170 = smul.u32 32, %s17
        %s171 = smul.u32 32, %s17
        %v173 = vld [vmem:[%s169] sm:$0xf]
        %v174 = vld [vmem:[%s169 + $0x4] sm:$0xf]
        %v175 = vld [vmem:[%s169 + $0x8] sm:$0xf]
        %v176 = vld [vmem:[%s169 + $0xc] sm:$0xf]
        %v177 = vld [vmem:[%s169 + $0x10] sm:$0xf]
        %v178 = vld [vmem:[%s169 + $0x14] sm:$0xf]
        %v179 = vld [vmem:[%s169 + $0x18] sm:$0xf]
        %v180 = vld [vmem:[%s169 + $0x1c] sm:$0xf]
        %v181 = vld [vmem:[%s169 + $0x20] sm:$0xf]
        %v182 = vld [vmem:[%s169 + $0x24] sm:$0xf]
        %v183 = vld [vmem:[%s169 + $0x28] sm:$0xf]
        %v184 = vld [vmem:[%s169 + $0x2c] sm:$0xf]
        %v185 = vld [vmem:[%s169 + $0x30] sm:$0xf]
        %v186 = vld [vmem:[%s169 + $0x34] sm:$0xf]
        %v187 = vld [vmem:[%s169 + $0x38] sm:$0xf]
        %v188 = vld [vmem:[%s169 + $0x3c] sm:$0xf]
        %v189 = vld [vmem:[%s169 + $0x40] sm:$0xf]
        %v190 = vld [vmem:[%s169 + $0x44] sm:$0xf]
        %v191 = vld [vmem:[%s169 + $0x48] sm:$0xf]
        %v192 = vld [vmem:[%s169 + $0x4c] sm:$0xf]
        %v193 = vld [vmem:[%s169 + $0x50] sm:$0xf]
        %v194 = vld [vmem:[%s169 + $0x54] sm:$0xf]
        %v195 = vld [vmem:[%s169 + $0x58] sm:$0xf]
        %v196 = vld [vmem:[%s169 + $0x5c] sm:$0xf]
        %v197 = vld [vmem:[%s169 + $0x60] sm:$0xf]
        %v198 = vld [vmem:[%s169 + $0x64] sm:$0xf]
        %v199 = vld [vmem:[%s169 + $0x68] sm:$0xf]
        %v200 = vld [vmem:[%s169 + $0x6c] sm:$0xf]
        %v201 = vld [vmem:[%s169 + $0x70] sm:$0xf]
        %v202 = vld [vmem:[%s169 + $0x74] sm:$0xf]
        %v203 = vld [vmem:[%s169 + $0x78] sm:$0xf]
        %v204 = vld [vmem:[%s169 + $0x7c] sm:$0xf]
        %v205 = vld [vmem:[%s1] sm:$0xf]
        %v206 = vld [vmem:[%s1 + $0x4] sm:$0xf]
        %v207 = vld [vmem:[%s1 + $0x8] sm:$0xf]
        %v208 = vld [vmem:[%s1 + $0xc] sm:$0xf]
        %v209 = vld [vmem:[%s1 + $0x10] sm:$0x3]
        %v210 = vld [vmem:[%s2] sm:$0x1]
        %v212 = vlaneseq
        %v213 = vshrl.u32 %v212, 7
        %v214 = vsub.s32 0, %v213
        %v215 = vrot.slane %v210, %v214
        %v249 = vunpack.c.l.b16 %v173
        %v250 = vunpack.c.l.b16 %v174
        %v251 = vunpack.c.l.b16 %v175
        %v252 = vunpack.c.l.b16 %v176
        %v253 = vunpack.c.l.b16 %v177
        %v254 = vunpack.c.l.b16 %v178
        %v255 = vunpack.c.l.b16 %v179
        %v256 = vunpack.c.l.b16 %v180
        %v257 = vunpack.c.l.b16 %v181
        %v258 = vunpack.c.l.b16 %v182
        %v259 = vunpack.c.l.b16 %v183
        %v260 = vunpack.c.l.b16 %v184
        %v261 = vunpack.c.l.b16 %v185
        %v262 = vunpack.c.l.b16 %v186
        %v263 = vunpack.c.l.b16 %v187
        %v264 = vunpack.c.l.b16 %v188
        %v265 = vunpack.c.l.b16 %v189
        %v266 = vunpack.c.l.b16 %v190
        %v267 = vunpack.c.l.b16 %v191
        %v268 = vunpack.c.l.b16 %v192
        %v269 = vunpack.c.l.b16 %v193
        %v270 = vunpack.c.l.b16 %v194
        %v271 = vunpack.c.l.b16 %v195
        %v272 = vunpack.c.l.b16 %v196
        %v273 = vunpack.c.l.b16 %v197
        %v274 = vunpack.c.l.b16 %v198
        %v275 = vunpack.c.l.b16 %v199
        %v276 = vunpack.c.l.b16 %v200
        %v277 = vunpack.c.l.b16 %v201
        %v278 = vunpack.c.l.b16 %v202
        %v279 = vunpack.c.l.b16 %v203
        %v280 = vunpack.c.l.b16 %v204
        %v281 = vpack.c.b16 %v250, %v249
        %v282 = vpack.c.b16 %v252, %v251
        %v283 = vpack.c.b16 %v254, %v253
        %v284 = vpack.c.b16 %v256, %v255
        %v285 = vpack.c.b16 %v258, %v257
        %v286 = vpack.c.b16 %v260, %v259
        %v287 = vpack.c.b16 %v262, %v261
        %v288 = vpack.c.b16 %v264, %v263
        %v289 = vpack.c.b16 %v266, %v265
        %v290 = vpack.c.b16 %v268, %v267
        %v291 = vpack.c.b16 %v270, %v269
        %v292 = vpack.c.b16 %v272, %v271
        %v293 = vpack.c.b16 %v274, %v273
        %v294 = vpack.c.b16 %v276, %v275
        %v295 = vpack.c.b16 %v278, %v277
        %v296 = vpack.c.b16 %v280, %v279
        %v302 = vunpack.c.l.b16 %v205
        %v303 = vunpack.c.l.b16 %v206
        %v304 = vunpack.c.l.b16 %v207
        %v305 = vunpack.c.l.b16 %v208
        %v306 = vunpack.c.l.b16 %v209
        %v307 = vpack.c.b16 %v303, %v302
        %v308 = vpack.c.b16 %v305, %v304
        %v309 = vpack.c.b16 %v306, %v306
        %vm312 = vcmask 293888
        %v314 = vsel %vm312, %v281, 0
        %v317 = vsel %vm312, %v282, 0
        %v320 = vsel %vm312, %v283, 0
        %v323 = vsel %vm312, %v284, 0
        %v326 = vsel %vm312, %v285, 0
        %v329 = vsel %vm312, %v286, 0
        %v332 = vsel %vm312, %v287, 0
        %v335 = vsel %vm312, %v288, 0
        %v338 = vsel %vm312, %v289, 0
        %v341 = vsel %vm312, %v290, 0
        %v344 = vsel %vm312, %v291, 0
        %v347 = vsel %vm312, %v292, 0
        %v350 = vsel %vm312, %v293, 0
        %v353 = vsel %vm312, %v294, 0
        %v356 = vsel %vm312, %v295, 0
        %v359 = vsel %vm312, %v296, 0
        %vm361 = vcmask 1041408
        %v363 = vsel %vm361, %v309, 0
        %365 = vmatprep.subr.bf16.mxu0 0
        %366 = vmatpush1.bf16.msra.mxu0 %v307
        %367 = vmatprep.subr.bf16.mxu0 0
        %368 = vmatpush1.bf16.msra.mxu0 %v308
        %369 = vmatprep.subr.bf16.mxu0 0
        %370 = vmatpush1.bf16.msra.mxu0 %v363
        %371 = vmatprep.subr.bf16.mxu0 0
        %372 = vmatpush1.bf16.msra.mxu0 0
        %373 = vmatprep.subr.bf16.mxu0 0
        %374 = vmatpush1.bf16.msra.mxu0 0
        %375 = vmatprep.subr.bf16.mxu0 0
        %376 = vmatpush1.bf16.msra.mxu0 0
        %377 = vmatprep.subr.bf16.mxu0 0
        %378 = vmatpush1.bf16.msra.mxu0 0
        %379 = vmatprep.subr.bf16.mxu0 0
        %380 = vmatpush1.bf16.msra.mxu0 0
        %381 = vmatprep.subr.bf16.mxu0 0
        %382 = vmatpush1.bf16.msra.mxu0 0
        %383 = vmatprep.subr.bf16.mxu0 0
        %384 = vmatpush1.bf16.msra.mxu0 0
        %385 = vmatprep.subr.bf16.mxu0 0
        %386 = vmatpush1.bf16.msra.mxu0 0
        %387 = vmatprep.subr.bf16.mxu0 0
        %388 = vmatpush1.bf16.msra.mxu0 0
        %389 = vmatprep.subr.bf16.mxu0 0
        %390 = vmatpush1.bf16.msra.mxu0 0
        %391 = vmatprep.subr.bf16.mxu0 0
        %392 = vmatpush1.bf16.msra.mxu0 0
        %393 = vmatprep.subr.bf16.mxu0 0
        %394 = vmatpush1.bf16.msra.mxu0 0
        %395 = vmatprep.subr.bf16.mxu0 0
        %396 = vmatpush1.bf16.msra.mxu0 0
        %397 = vmatprep.mubr.bf16.mxu0 0
        %398 = vmatmul.mubr.bf16.gmra.mrb[0].mxu0 %v314
        %v399 = vpop.f32.mrb[0].mxu0
        %v400 = vadd.f32 %v215, %v399
        %v401 = vpop.f32.mrb[0].mxu0
        %v402 = vpop.f32.mrb[0].mxu0
        %v403 = vadd.f32 %v215, %v402
        %v404 = vpop.f32.mrb[0].mxu0
        %405 = vmatprep.mubr.bf16.mxu0 0
        %406 = vmatmul.mubr.bf16.gmra.mrb[0].mxu0 %v317
        %v407 = vpop.f32.mrb[0].mxu0
        %v408 = vadd.f32 %v215, %v407
        %v409 = vpop.f32.mrb[0].mxu0
        %v410 = vpop.f32.mrb[0].mxu0
        %v411 = vadd.f32 %v215, %v410
        %v412 = vpop.f32.mrb[0].mxu0
        %413 = vmatprep.mubr.bf16.mxu0 0
        %414 = vmatmul.mubr.bf16.gmra.mrb[0].mxu0 %v320
        %v415 = vpop.f32.mrb[0].mxu0
        %v416 = vadd.f32 %v215, %v415
        %v417 = vpop.f32.mrb[0].mxu0
        %v418 = vpop.f32.mrb[0].mxu0
        %v419 = vadd.f32 %v215, %v418
        %v420 = vpop.f32.mrb[0].mxu0
        %421 = vmatprep.mubr.bf16.mxu0 0
        %422 = vmatmul.mubr.bf16.gmra.mrb[0].mxu0 %v323
        %v423 = vpop.f32.mrb[0].mxu0
        %v424 = vadd.f32 %v215, %v423
        %v425 = vpop.f32.mrb[0].mxu0
        %v426 = vpop.f32.mrb[0].mxu0
        %v427 = vadd.f32 %v215, %v426
        %v428 = vpop.f32.mrb[0].mxu0
        %429 = vmatprep.mubr.bf16.mxu0 0
        %430 = vmatmul.mubr.bf16.gmra.mrb[0].mxu0 %v326
        %v431 = vpop.f32.mrb[0].mxu0
        %v432 = vadd.f32 %v215, %v431
        %v433 = vpop.f32.mrb[0].mxu0
        %v434 = vpop.f32.mrb[0].mxu0
        %v435 = vadd.f32 %v215, %v434
        %v436 = vpop.f32.mrb[0].mxu0
        %437 = vmatprep.mubr.bf16.mxu0 0
        %438 = vmatmul.mubr.bf16.gmra.mrb[0].mxu0 %v329
        %v439 = vpop.f32.mrb[0].mxu0
        %v440 = vadd.f32 %v215, %v439
        %v441 = vpop.f32.mrb[0].mxu0
        %v442 = vpop.f32.mrb[0].mxu0
        %v443 = vadd.f32 %v215, %v442
        %v444 = vpop.f32.mrb[0].mxu0
        %445 = vmatprep.mubr.bf16.mxu0 0
        %446 = vmatmul.mubr.bf16.gmra.mrb[0].mxu0 %v332
        %v447 = vpop.f32.mrb[0].mxu0
        %v448 = vadd.f32 %v215, %v447
        %v449 = vpop.f32.mrb[0].mxu0
        %v450 = vpop.f32.mrb[0].mxu0
        %v451 = vadd.f32 %v215, %v450
        %v452 = vpop.f32.mrb[0].mxu0
        %453 = vmatprep.mubr.bf16.mxu0 0
        %454 = vmatmul.mubr.bf16.gmra.mrb[0].mxu0 %v335
        %v455 = vpop.f32.mrb[0].mxu0
        %v456 = vadd.f32 %v215, %v455
        %v457 = vpop.f32.mrb[0].mxu0
        %v458 = vpop.f32.mrb[0].mxu0
        %v459 = vadd.f32 %v215, %v458
        %v460 = vpop.f32.mrb[0].mxu0
        %461 = vmatprep.mubr.bf16.mxu0 0
        %462 = vmatmul.mubr.bf16.gmra.mrb[0].mxu0 %v338
        %v463 = vpop.f32.mrb[0].mxu0
        %v464 = vadd.f32 %v215, %v463
        %v465 = vpop.f32.mrb[0].mxu0
        %v466 = vpop.f32.mrb[0].mxu0
        %v467 = vadd.f32 %v215, %v466
        %v468 = vpop.f32.mrb[0].mxu0
        %469 = vmatprep.mubr.bf16.mxu0 0
        %470 = vmatmul.mubr.bf16.gmra.mrb[0].mxu0 %v341
        %v471 = vpop.f32.mrb[0].mxu0
        %v472 = vadd.f32 %v215, %v471
        %v473 = vpop.f32.mrb[0].mxu0
        %v474 = vpop.f32.mrb[0].mxu0
        %v475 = vadd.f32 %v215, %v474
        %v476 = vpop.f32.mrb[0].mxu0
        %477 = vmatprep.mubr.bf16.mxu0 0
        %478 = vmatmul.mubr.bf16.gmra.mrb[0].mxu0 %v344
        %v479 = vpop.f32.mrb[0].mxu0
        %v480 = vadd.f32 %v215, %v479
        %v481 = vpop.f32.mrb[0].mxu0
        %v482 = vpop.f32.mrb[0].mxu0
        %v483 = vadd.f32 %v215, %v482
        %v484 = vpop.f32.mrb[0].mxu0
        %485 = vmatprep.mubr.bf16.mxu0 0
        %486 = vmatmul.mubr.bf16.gmra.mrb[0].mxu0 %v347
        %v487 = vpop.f32.mrb[0].mxu0
        %v488 = vadd.f32 %v215, %v487
        %v489 = vpop.f32.mrb[0].mxu0
        %v490 = vpop.f32.mrb[0].mxu0
        %v491 = vadd.f32 %v215, %v490
        %v492 = vpop.f32.mrb[0].mxu0
        %493 = vmatprep.mubr.bf16.mxu0 0
        %494 = vmatmul.mubr.bf16.gmra.mrb[0].mxu0 %v350
        %v495 = vpop.f32.mrb[0].mxu0
        %v496 = vadd.f32 %v215, %v495
        %v497 = vpop.f32.mrb[0].mxu0
        %v498 = vpop.f32.mrb[0].mxu0
        %v499 = vadd.f32 %v215, %v498
        %v500 = vpop.f32.mrb[0].mxu0
        %501 = vmatprep.mubr.bf16.mxu0 0
        %502 = vmatmul.mubr.bf16.gmra.mrb[0].mxu0 %v353
        %v503 = vpop.f32.mrb[0].mxu0
        %v504 = vadd.f32 %v215, %v503
        %v505 = vpop.f32.mrb[0].mxu0
        %v506 = vpop.f32.mrb[0].mxu0
        %v507 = vadd.f32 %v215, %v506
        %v508 = vpop.f32.mrb[0].mxu0
        %509 = vmatprep.mubr.bf16.mxu0 0
        %510 = vmatmul.mubr.bf16.gmra.mrb[0].mxu0 %v356
        %v511 = vpop.f32.mrb[0].mxu0
        %v512 = vadd.f32 %v215, %v511
        %v513 = vpop.f32.mrb[0].mxu0
        %v514 = vpop.f32.mrb[0].mxu0
        %v515 = vadd.f32 %v215, %v514
        %v516 = vpop.f32.mrb[0].mxu0
        %517 = vmatprep.mubr.bf16.mxu0 0
        %518 = vmatmul.mubr.bf16.gmra.mrb[0].mxu0 %v359
        %v519 = vpop.f32.mrb[0].mxu0
        %v520 = vadd.f32 %v215, %v519
        %v521 = vpop.f32.mrb[0].mxu0
        %v522 = vpop.f32.mrb[0].mxu0
        %v523 = vadd.f32 %v215, %v522
        %v524 = vpop.f32.mrb[0].mxu0
        %525 = vdwg.mxu0
        %v526 = vmax.f32 %v400, 0.0
        %v527 = vmax.f32 %v403, 0.0
        %v528 = vmax.f32 %v408, 0.0
        %v529 = vmax.f32 %v411, 0.0
        %v530 = vmax.f32 %v416, 0.0
        %v531 = vmax.f32 %v419, 0.0
        %v532 = vmax.f32 %v424, 0.0
        %v533 = vmax.f32 %v427, 0.0
        %v534 = vmax.f32 %v432, 0.0
        %v535 = vmax.f32 %v435, 0.0
        %v536 = vmax.f32 %v440, 0.0
        %v537 = vmax.f32 %v443, 0.0
        %v538 = vmax.f32 %v448, 0.0
        %v539 = vmax.f32 %v451, 0.0
        %v540 = vmax.f32 %v456, 0.0
        %v541 = vmax.f32 %v459, 0.0
        %v542 = vmax.f32 %v464, 0.0
        %v543 = vmax.f32 %v467, 0.0
        %v544 = vmax.f32 %v472, 0.0
        %v545 = vmax.f32 %v475, 0.0
        %v546 = vmax.f32 %v480, 0.0
        %v547 = vmax.f32 %v483, 0.0
        %v548 = vmax.f32 %v488, 0.0
        %v549 = vmax.f32 %v491, 0.0
        %v550 = vmax.f32 %v496, 0.0
        %v551 = vmax.f32 %v499, 0.0
        %v552 = vmax.f32 %v504, 0.0
        %v553 = vmax.f32 %v507, 0.0
        %v554 = vmax.f32 %v512, 0.0
        %v555 = vmax.f32 %v515, 0.0
        %v556 = vmax.f32 %v520, 0.0
        %v557 = vmax.f32 %v523, 0.0
        %vm558 = vcmask 261120
        %559 = vst.msk [vmem:[%s164] sm:$0xff] %vm558, %v526
        %560 = vst.msk [vmem:[%s164 + $0x8] sm:$0xff] %vm558, %v527
        %561 = vst.msk [vmem:[%s164 + $0x10] sm:$0xff] %vm558, %v528
        %562 = vst.msk [vmem:[%s164 + $0x18] sm:$0xff] %vm558, %v529
        %563 = vst.msk [vmem:[%s164 + $0x20] sm:$0xff] %vm558, %v530
        %564 = vst.msk [vmem:[%s164 + $0x28] sm:$0xff] %vm558, %v531
        %565 = vst.msk [vmem:[%s164 + $0x30] sm:$0xff] %vm558, %v532
        %566 = vst.msk [vmem:[%s164 + $0x38] sm:$0xff] %vm558, %v533
        %567 = vst.msk [vmem:[%s164 + $0x40] sm:$0xff] %vm558, %v534
        %568 = vst.msk [vmem:[%s164 + $0x48] sm:$0xff] %vm558, %v535
        %569 = vst.msk [vmem:[%s164 + $0x50] sm:$0xff] %vm558, %v536
        %570 = vst.msk [vmem:[%s164 + $0x58] sm:$0xff] %vm558, %v537
        %571 = vst.msk [vmem:[%s164 + $0x60] sm:$0xff] %vm558, %v538
        %572 = vst.msk [vmem:[%s164 + $0x68] sm:$0xff] %vm558, %v539
        %573 = vst.msk [vmem:[%s164 + $0x70] sm:$0xff] %vm558, %v540
        %574 = vst.msk [vmem:[%s164 + $0x78] sm:$0xff] %vm558, %v541
        %575 = vst.msk [vmem:[%s164 + $0x80] sm:$0xff] %vm558, %v542
        %576 = vst.msk [vmem:[%s164 + $0x88] sm:$0xff] %vm558, %v543
        %577 = vst.msk [vmem:[%s164 + $0x90] sm:$0xff] %vm558, %v544
        %578 = vst.msk [vmem:[%s164 + $0x98] sm:$0xff] %vm558, %v545
        %579 = vst.msk [vmem:[%s164 + $0xa0] sm:$0xff] %vm558, %v546
        %580 = vst.msk [vmem:[%s164 + $0xa8] sm:$0xff] %vm558, %v547
        %581 = vst.msk [vmem:[%s164 + $0xb0] sm:$0xff] %vm558, %v548
        %582 = vst.msk [vmem:[%s164 + $0xb8] sm:$0xff] %vm558, %v549
        %583 = vst.msk [vmem:[%s164 + $0xc0] sm:$0xff] %vm558, %v550
        %584 = vst.msk [vmem:[%s164 + $0xc8] sm:$0xff] %vm558, %v551
        %585 = vst.msk [vmem:[%s164 + $0xd0] sm:$0xff] %vm558, %v552
        %586 = vst.msk [vmem:[%s164 + $0xd8] sm:$0xff] %vm558, %v553
        %587 = vst.msk [vmem:[%s164 + $0xe0] sm:$0xff] %vm558, %v554
        %588 = vst.msk [vmem:[%s164 + $0xe8] sm:$0xff] %vm558, %v555
        %589 = vst.msk [vmem:[%s164 + $0xf0] sm:$0xff] %vm558, %v556
        %590 = vst.msk [vmem:[%s164 + $0xf8] sm:$0xff] %vm558, %v557
        %s591 = sand.u32 %s93, 1
        %s592 = scalar_lea.sflag [#allocation3], %s591
        %s593 = sand.u32 %s93, 1
        %s594 = smul.addr %s593, 256
        %s595 = scalar_lea.vmem [#allocation2], %s594
        // Predicated region
        $region33: #{conv_layer_forward.1} parent=31 // pred_check
          %p596 = pneg %p103
        $region34: #{conv_layer_forward.1} parent=31 // pred_check_branch
          %598 = sbr.rel (%p596) target = $region36
        $region35: #{conv_layer_forward.1} parent=31 // pred_region
          %s599 = smul.u32 32, %s17
          %s601 = ssub.s32 4096, 4096
          %602 = vsyncadd %s592, %s601
          %s603 = smul.addr %s599, 128
          %s604 = scalar_lea.hbm %s3, %s603
          %s605 = sshll.u32 %s595, 4
          %s606 = int_to_ptr.vmem [resolvable:$true] %s605
          %611 = dma.vmem_to_hbm [thread:$0]  %s606, 4096, %s604, %s592, 128, 128, 8
        $region36: #{conv_layer_forward.1} parent=31 // pred_fallthru
          _
      $region32: #{conv_layer_forward.1} parent=5 // pred_fallthru
        _
      %p612 = scmp.le.s32.totalorder 2, %s12
      // Predicated region
      $region37: #{conv_layer_forward.1} parent=5 // pred_check
        %p613 = pneg %p612
      $region38: #{conv_layer_forward.1} parent=5 // pred_check_branch
        %615 = sbr.rel (%p613) target = $region40
      $region39: #{conv_layer_forward.1} parent=5 // pred_region
        %s616 = ssub.s32 %s12, 2
        // Predicated region
        $region41: #{conv_layer_forward.1} parent=39 // pred_check
          %p617 = pneg %p109
        $region42: #{conv_layer_forward.1} parent=39 // pred_check_branch
          %619 = sbr.rel (%p617) target = $region44
        $region43: #{conv_layer_forward.1} parent=39 // pred_region
          %s620 = sand.u32 %s94, 1
          %s621 = scalar_lea.sflag [#allocation3], %s620
          %s622 = sand.u32 %s94, 1
          %s623 = smul.addr %s622, 256
          %s624 = scalar_lea.vmem [#allocation2], %s623
          %625 = dma.done %s621, 4096
        $region44: #{conv_layer_forward.1} parent=39 // pred_fallthru
          _
      $region40: #{conv_layer_forward.1} parent=5 // pred_fallthru
        _
    $region6: #{conv_layer_forward.1} parent=1 // loop_footer
      %s16 = sadd.s32 1, %s12
    $region7: #{conv_layer_forward.1} parent=1 // loop_footer_branch
      %11 = sbr.rel target = $region3
    $region8: #{conv_layer_forward.1} parent=1 // loop_exit
      _
    %626 = vsyncpa [#allocation3], 1
    %s627 = scalar_lea.sflag [#allocation3], 1
    %628 = vsyncpa %s627, 1

</llo_original>
